<compile_context>
chip_gen: v7x
topology: tpu7x:2x2x1
jax: 0.10.0
libtpu: 0.0.40
codegen_flags: <defaults>
</compile_context>

<pallas_src>
import math
from typing import NamedTuple

import jax
import jax.numpy as jnp
from jax.experimental import pallas as pl
from jax.experimental.pallas import tpu as pltpu


def _round_up(x, m):
    return (x + m - 1) // m * m


# ---------------------------------------------------------------------------
# Kernel
# ---------------------------------------------------------------------------
def _ffn_kernel(x_ref, w1_ref, b1_ref, w2_ref, b2_ref, o_ref, acc_ref):
    # x_ref:  (tm, Hp)   row tile of tokens (operand dtype, e.g. bf16)
    # w1_ref: (Hp, tk)   lin1 weight chunk (columns k*tk : (k+1)*tk)
    # b1_ref: (1,  tk)   lin1 bias chunk (f32)
    # w2_ref: (tk, Hp)   lin2 weight chunk (rows    k*tk : (k+1)*tk)
    # b2_ref: (1,  Hp)   lin2 bias (f32, applied once in the epilogue)
    # o_ref:  (tm, Hp)   output row tile
    # acc_ref:(tm, Hp)   f32 accumulator scratch, resident across k
    k = pl.program_id(1)

    @pl.when(k == 0)
    def _init():
        acc_ref[...] = jnp.zeros_like(acc_ref)

    h = jnp.dot(x_ref[...], w1_ref[...], preferred_element_type=jnp.float32)
    h = jnp.maximum(h + b1_ref[...], 0.0)                      # bias + ReLU (VPU)
    acc_ref[...] += jnp.dot(h.astype(w2_ref.dtype), w2_ref[...],
                            preferred_element_type=jnp.float32)

    @pl.when(k == pl.num_programs(1) - 1)
    def _store():
        # b2 added exactly once; dropout == identity in eval mode.
        o_ref[...] = (acc_ref[...] + b2_ref[...]).astype(o_ref.dtype)


# ---------------------------------------------------------------------------
# Generation-aware configuration
# ---------------------------------------------------------------------------
_GEN_CFG = {
    # tm: row tile (weight-reuse / arithmetic-intensity knob)
    # tk: intermediate-dim chunk; tk_align: MXU-friendly granularity
    "v5e":     dict(tm=256,  tk=512, tk_align=128, default_vmem=128 * 2**20),
    "v6e":     dict(tm=1024, tk=512, tk_align=256, default_vmem=128 * 2**20),
    "v7x":     dict(tm=512,  tk=512, tk_align=256, default_vmem=64 * 2**20),
    "other":   dict(tm=512,  tk=512, tk_align=128, default_vmem=128 * 2**20),
    "unknown": dict(tm=256,  tk=512, tk_align=128, default_vmem=64 * 2**20),
}


def _detect_tpu():
    kind = ""
    try:
        kind = jax.devices()[0].device_kind.lower()
    except Exception:
        pass
    if "v5e" in kind or "v5 lite" in kind or "v5lite" in kind:
        gen = "v5e"
    elif "v6" in kind:
        gen = "v6e"
    elif "v7" in kind or "7x" in kind:
        gen = "v7x"
    elif "v4" in kind or "v5" in kind:          # v4 / v5p: 128 MiB VMEM parts
        gen = "other"
    else:
        gen = "unknown"
    vmem_cap = None
    try:
        vmem_cap = int(pltpu.get_tpu_info().vmem_capacity_bytes)
    except Exception:
        vmem_cap = None
    if not vmem_cap or vmem_cap <= 0:
        vmem_cap = _GEN_CFG[gen]["default_vmem"]
    return gen, vmem_cap


def _vmem_bytes(tm, tk, h_pad, op_b, out_b):
    # 1.15x headroom for compiler-internal scratch / alignment.
    return int(1.15 * (
        2 * tm * h_pad * op_b          # x tile (double buffered)
        + 2 * h_pad * tk * op_b        # W1 chunk
        + 2 * tk * h_pad * op_b        # W2 chunk
        + 2 * tm * h_pad * out_b       # out tile
        + 2 * (tk + h_pad) * 4         # bias chunks (f32)
        + tm * h_pad * 4               # f32 accumulator scratch
        + tm * tk * (4 + op_b)))       # materialized f32 h (+ its cast copy)


def _fit_tiles(tm, tk, tk_align, h_pad, op_b, out_b, budget):
    # Shrink tk first (keeps tm / weight reuse), then tm, until it fits.
    while _vmem_bytes(tm, tk, h_pad, op_b, out_b) > budget:
        if tk > tk_align:
            tk = max(tk_align, _round_up(tk // 2, 128))
        elif tm > 128:
            tm = max(128, tm // 2)
        elif tk > 128:
            tk = 128
        elif tm > 8:
            tm = max(8, tm // 2)
        else:
            break
    return tm, tk


# ---------------------------------------------------------------------------
# Parameter preparation (padding/casting hoisted out of the call path)
# ---------------------------------------------------------------------------
class FFNParams(NamedTuple):
    w1: jax.Array        # (h_pad, i_pad)  operand dtype
    b1: jax.Array        # (1, i_pad)      f32
    w2: jax.Array        # (i_pad, h_pad)  operand dtype
    b2: jax.Array        # (1, h_pad)      f32
    hidden: int
    inter: int
    h_pad: int
    i_pad: int
    tm: int
    tk: int
    vmem_limit: int
    gen: str


def prepare_ffn_params(w1, b1, w2, b2, *, operand_dtype=jnp.bfloat16,
                       tm=None, tk=None):
    """Pad + cast weights ONCE into kernel layout and pick per-generation tiles.

    w1: [hidden, inter], b1: [inter], w2: [inter, hidden], b2: [hidden]
    (torch nn.Linear stores weight as [out, in]; transpose before calling).
    operand_dtype: dtype fed to the MXU (default bf16; accumulation stays f32).
    """
    hidden, inter = w1.shape
    assert w2.shape == (inter, hidden)
    op_dtype = jnp.dtype(operand_dtype)
    op_b = op_dtype.itemsize
    out_b = 4                                    # assume f32 activations (worst case)

    gen, vmem_cap = _detect_tpu()
    cfg = _GEN_CFG[gen]
    budget = max(32 * 2**20, int(vmem_cap * 0.85))

    h_pad = _round_up(hidden, 128)
    if tm is None or tk is None:
        tk_eff = min(cfg["tk"], _round_up(inter, cfg["tk_align"]))
        tm_eff, tk_eff = _fit_tiles(cfg["tm"], tk_eff, cfg["tk_align"],
                                    h_pad, op_b, out_b, budget)
    else:
        tm_eff = max(8, _round_up(tm, 8))
        tk_eff = max(128, _round_up(tk, 128))
    i_pad = _round_up(inter, tk_eff)

    w1p = jnp.pad(w1, ((0, h_pad - hidden), (0, i_pad - inter))).astype(op_dtype)
    w2p = jnp.pad(w2, ((0, i_pad - inter), (0, h_pad - hidden))).astype(op_dtype)
    b1p = jnp.pad(b1.astype(jnp.float32), (0, i_pad - inter)).reshape(1, i_pad)
    b2p = jnp.pad(b2.astype(jnp.float32), (0, h_pad - hidden)).reshape(1, h_pad)

    return FFNParams(w1p, b1p, w2p, b2p, hidden, inter, h_pad, i_pad,
                     tm_eff, tk_eff, int(budget), gen)


# ---------------------------------------------------------------------------
# Forward pass
# ---------------------------------------------------------------------------
def feed_forward(x, params: FFNParams):
    """x: [..., hidden] -> [..., hidden].  Eval-mode FFN (dropout = identity)."""
    hidden, h_pad, i_pad = params.hidden, params.h_pad, params.i_pad
    assert x.shape[-1] == hidden
    lead = x.shape[:-1]
    n = int(math.prod(lead)) if lead else 1
    out_dtype = x.dtype
    op_dtype = params.w1.dtype
    op_b = jnp.dtype(op_dtype).itemsize
    out_b = jnp.dtype(out_dtype).itemsize

    # Row tile: never larger than the (padded) token count, multiple of 8.
    n8 = _round_up(n, 8)
    tm = min(params.tm, n8)
    # v7x has 2 TensorCores: keep >= 2 tiles on the 'parallel' row axis.
    if params.gen == "v7x" and tm >= n8 and n8 >= 16:
        tm = _round_up((n8 + 1) // 2, 8)
    n_pad = _round_up(n, tm)
    tk = params.tk
    grid = (n_pad // tm, i_pad // tk)

    xp = jnp.pad(x.reshape(n, hidden),
                 ((0, n_pad - n), (0, h_pad - hidden))).astype(op_dtype)

    # Weights are re-streamed once per row tile.
    row_tiles = grid[0]
    w_bytes = (params.w1.size + params.w2.size) * op_b
    b_bytes = (params.b1.size + params.b2.size) * 4
    cost = pl.CostEstimate(
        flops=int(4 * n_pad * h_pad * i_pad),    # two matmuls, 2 flops/MAC
        transcendentals=0,
        bytes_accessed=int(xp.size * op_b + row_tiles * (w_bytes + b_bytes)
                           + n_pad * h_pad * out_b))

    out_pad = pl.pallas_call(
        _ffn_kernel,
        out_shape=jax.ShapeDtypeStruct((n_pad, h_pad), out_dtype),
        grid_spec=pltpu.PrefetchScalarGridSpec(
            num_scalar_prefetch=0,
            grid=grid,
            in_specs=[
                pl.BlockSpec((tm, h_pad), lambda i, k: (i, 0)),    # x tile
                pl.BlockSpec((h_pad, tk), lambda i, k: (0, k)),    # W1 chunk
                pl.BlockSpec((1, tk), lambda i, k: (0, k)),        # b1 chunk
                pl.BlockSpec((tk, h_pad), lambda i, k: (k, 0)),    # W2 chunk
                pl.BlockSpec((1, h_pad), lambda i, k: (0, 0)),     # b2 (invariant)
            ],
            out_specs=pl.BlockSpec((tm, h_pad), lambda i, k: (i, 0)),
            scratch_shapes=[pltpu.VMEM((tm, h_pad), jnp.float32)],
        ),
        compiler_params=pltpu.CompilerParams(
            dimension_semantics=("parallel", "arbitrary"),
            vmem_limit_bytes=params.vmem_limit),
        cost_estimate=cost,
    )(xp, params.w1, params.b1, params.w2, params.b2)

    return out_pad[:n, :hidden].reshape(*lead, hidden)


def init_params(key, hidden_size, intermediate_dim, dtype=jnp.float32):
    # Deterministic init mimicking nn.Linear default (uniform +/- 1/sqrt(fan_in)).
    k1, k2, k3, k4 = jax.random.split(key, 4)
    lim1 = 1.0 / jnp.sqrt(hidden_size)
    lim2 = 1.0 / jnp.sqrt(intermediate_dim)
    # torch stores Linear weight as [out, in]; we keep [in, out] for the kernel.
    w1 = jax.random.uniform(k1, (hidden_size, intermediate_dim), dtype, -lim1, lim1)
    b1 = jax.random.uniform(k2, (intermediate_dim,), dtype, -lim1, lim1)
    w2 = jax.random.uniform(k3, (intermediate_dim, hidden_size), dtype, -lim2, lim2)
    b2 = jax.random.uniform(k4, (hidden_size,), dtype, -lim2, lim2)
    return w1, b1, w2, b2


if __name__ == "__main__":
    # Small shapes consistent with the module: batch=2, seq=8, hidden=32, inter=64.
    batch, seq, hidden, inter = 2, 8, 32, 64
    key = jax.random.PRNGKey(0)
    kx, kp = jax.random.split(key)

    x = jax.random.normal(kx, (batch, seq, hidden), jnp.float32)
    w1, b1, w2, b2 = init_params(kp, hidden, inter)
    ref = jnp.maximum(x @ w1 + b1, 0.0) @ w2 + b2

    # 1) default path: bf16 operands, f32 accumulation (MXU-rate path on all gens)
    params = prepare_ffn_params(w1, b1, w2, b2)
    out = feed_forward(x, params)
    jax.block_until_ready(out)
    assert out.shape == x.shape and out.dtype == x.dtype
    assert jnp.allclose(out, ref, atol=5e-2, rtol=5e-2), "bf16 mismatch vs reference"

    # 2) f32 operand path: matches the torch reference to tight tolerance
    params_f32 = prepare_ffn_params(w1, b1, w2, b2, operand_dtype=jnp.float32)
    out_f32 = feed_forward(x, params_f32)
    jax.block_until_ready(out_f32)
    assert jnp.allclose(out_f32, ref, atol=1e-5, rtol=1e-5), "f32 mismatch vs reference"

    # 3) unaligned dims + forced small tiles: exercises row tiling, k-chunk
    #    accumulation and the padding/slicing paths.
    h2, i2 = 40, 200
    kx2, kp2 = jax.random.split(jax.random.PRNGKey(1))
    x2 = jax.random.normal(kx2, (4, 16, h2), jnp.float32)
    w1b, b1b, w2b, b2b = init_params(kp2, h2, i2)
    ref2 = jnp.maximum(x2 @ w1b + b1b, 0.0) @ w2b + b2b
    params2 = prepare_ffn_params(w1b, b1b, w2b, b2b, tm=16, tk=128)
    out2 = feed_forward(x2, params2)
    jax.block_until_ready(out2)
    assert jnp.allclose(out2, ref2, atol=5e-2, rtol=5e-2), "tiled bf16 mismatch vs reference"

    print("KERNEL_OK")
</pallas_src>

<mosaic_0001>
module attributes {stable_mosaic.version = 11 : i64} {
  func.func @_ffn_kernel(%arg0: i32, %arg1: i32, %arg2: memref<16x128xbf16, #tpu.memory_space<vmem>>, %arg3: memref<128x128xbf16, #tpu.memory_space<vmem>>, %arg4: memref<1x128xf32, #tpu.memory_space<vmem>>, %arg5: memref<128x128xbf16, #tpu.memory_space<vmem>>, %arg6: memref<1x128xf32, #tpu.memory_space<vmem>>, %arg7: memref<16x128xf32, #tpu.memory_space<vmem>>, %arg8: memref<16x128xf32, #tpu.memory_space<vmem>>) attributes {dimension_semantics = [#tpu.dimension_semantics<parallel>, #tpu.dimension_semantics<arbitrary>], iteration_bounds = array<i64: 1, 1>, scalar_prefetch = 0 : i64, scratch_operands = 1 : i64, tpu.core_type = #tpu.core_type<tc>, window_params = [{transform_indices = @transform_0, window_bounds = array<i64: 16, 128>}, {transform_indices = @transform_1, window_bounds = array<i64: 128, 128>}, {transform_indices = @transform_2, window_bounds = array<i64: 1, 128>}, {transform_indices = @transform_3, window_bounds = array<i64: 128, 128>}, {pipeline_mode = #tpu.pipeline_mode<synchronous>, transform_indices = @transform_4, window_bounds = array<i64: 1, 128>}, {transform_indices = @transform_5, window_bounds = array<i64: 16, 128>}]} {
    %c0_i32 = arith.constant 0 : i32
    %0 = arith.cmpi eq, %arg1, %c0_i32 : i32
    %1 = arith.extui %0 : i1 to i32
    %c0_i32_0 = arith.constant 0 : i32
    %2 = arith.cmpi ne, %1, %c0_i32_0 : i32
    scf.if %2 {
      %cst_16 = arith.constant 0.000000e+00 : f32
      %20 = vector.broadcast %cst_16 : f32 to vector<16x128xf32>
      %c0_17 = arith.constant 0 : index
      %c0_18 = arith.constant 0 : index
      %21 = vector.load %arg8[%c0_17, %c0_18] : memref<16x128xf32, #tpu.memory_space<vmem>>, vector<16x128xf32>
      tpu.vector_store %arg8[%c0_17, %c0_18], %20 {strides = array<i32>} : memref<16x128xf32, #tpu.memory_space<vmem>>, vector<16x128xf32>,
    } else {
    }
    %c0 = arith.constant 0 : index
    %c0_1 = arith.constant 0 : index
    %3 = vector.load %arg2[%c0, %c0_1] : memref<16x128xbf16, #tpu.memory_space<vmem>>, vector<16x128xbf16>
    %c0_2 = arith.constant 0 : index
    %c0_3 = arith.constant 0 : index
    %4 = vector.load %arg3[%c0_2, %c0_3] : memref<128x128xbf16, #tpu.memory_space<vmem>>, vector<128x128xbf16>
    %cst = arith.constant dense<0.000000e+00> : vector<16x128xf32>
    %5 = tpu.matmul %3, %4, %cst {dimension_numbers = #tpu.dot_dimension_numbers<[1], [0], [0], [1], [0, 0, 1, 1], [], []>} : vector<16x128xbf16>, vector<128x128xbf16>, vector<16x128xf32> -> vector<16x128xf32>
    %c0_4 = arith.constant 0 : index
    %c0_5 = arith.constant 0 : index
    %6 = vector.load %arg4[%c0_4, %c0_5] : memref<1x128xf32, #tpu.memory_space<vmem>>, vector<1x128xf32>
    %7 = vector.broadcast %6 : vector<1x128xf32> to vector<16x128xf32>
    %8 = arith.addf %5, %7 : vector<16x128xf32>
    %cst_6 = arith.constant 0.000000e+00 : f32
    %9 = vector.broadcast %cst_6 : f32 to vector<16x128xf32>
    %10 = arith.maximumf %8, %9 : vector<16x128xf32>
    %c0_7 = arith.constant 0 : index
    %c0_8 = arith.constant 0 : index
    %11 = vector.load %arg8[%c0_7, %c0_8] : memref<16x128xf32, #tpu.memory_space<vmem>>, vector<16x128xf32>
    %12 = arith.truncf %10 : vector<16x128xf32> to vector<16x128xbf16>
    %c0_9 = arith.constant 0 : index
    %c0_10 = arith.constant 0 : index
    %13 = vector.load %arg5[%c0_9, %c0_10] : memref<128x128xbf16, #tpu.memory_space<vmem>>, vector<128x128xbf16>
    %cst_11 = arith.constant dense<0.000000e+00> : vector<16x128xf32>
    %14 = tpu.matmul %12, %13, %cst_11 {dimension_numbers = #tpu.dot_dimension_numbers<[1], [0], [0], [1], [0, 0, 1, 1], [], []>} : vector<16x128xbf16>, vector<128x128xbf16>, vector<16x128xf32> -> vector<16x128xf32>
    %15 = arith.addf %11, %14 : vector<16x128xf32>
    %c0_12 = arith.constant 0 : index
    %c0_13 = arith.constant 0 : index
    %16 = vector.load %arg8[%c0_12, %c0_13] : memref<16x128xf32, #tpu.memory_space<vmem>>, vector<16x128xf32>
    tpu.vector_store %arg8[%c0_12, %c0_13], %15 {strides = array<i32>} : memref<16x128xf32, #tpu.memory_space<vmem>>, vector<16x128xf32>,
    %c0_i32_14 = arith.constant 0 : i32
    %17 = arith.cmpi eq, %arg1, %c0_i32_14 : i32
    %18 = arith.extui %17 : i1 to i32
    %c0_i32_15 = arith.constant 0 : i32
    %19 = arith.cmpi ne, %18, %c0_i32_15 : i32
    scf.if %19 {
      %c0_16 = arith.constant 0 : index
      %c0_17 = arith.constant 0 : index
      %20 = vector.load %arg8[%c0_16, %c0_17] : memref<16x128xf32, #tpu.memory_space<vmem>>, vector<16x128xf32>
      %c0_18 = arith.constant 0 : index
      %c0_19 = arith.constant 0 : index
      %21 = vector.load %arg6[%c0_18, %c0_19] : memref<1x128xf32, #tpu.memory_space<vmem>>, vector<1x128xf32>
      %22 = vector.broadcast %21 : vector<1x128xf32> to vector<16x128xf32>
      %23 = arith.addf %20, %22 : vector<16x128xf32>
      %c0_20 = arith.constant 0 : index
      %c0_21 = arith.constant 0 : index
      %24 = vector.load %arg7[%c0_20, %c0_21] : memref<16x128xf32, #tpu.memory_space<vmem>>, vector<16x128xf32>
      tpu.vector_store %arg7[%c0_20, %c0_21], %23 {strides = array<i32>} : memref<16x128xf32, #tpu.memory_space<vmem>>, vector<16x128xf32>,
    } else {
    }
    return
  }
  func.func @transform_0(%arg0: i32, %arg1: i32) -> (i32, i32) {
    %c0_i32 = arith.constant 0 : i32
    %c0_i32_0 = arith.constant 0 : i32
    return %arg0, %c0_i32 : i32, i32
  }
  func.func @transform_1(%arg0: i32, %arg1: i32) -> (i32, i32) {
    %c0_i32 = arith.constant 0 : i32
    %c0_i32_0 = arith.constant 0 : i32
    return %c0_i32, %arg1 : i32, i32
  }
  func.func @transform_2(%arg0: i32, %arg1: i32) -> (i32, i32) {
    %c0_i32 = arith.constant 0 : i32
    %c0_i32_0 = arith.constant 0 : i32
    return %c0_i32, %arg1 : i32, i32
  }
  func.func @transform_3(%arg0: i32, %arg1: i32) -> (i32, i32) {
    %c0_i32 = arith.constant 0 : i32
    %c0_i32_0 = arith.constant 0 : i32
    return %arg1, %c0_i32 : i32, i32
  }
  func.func @transform_4(%arg0: i32, %arg1: i32) -> (i32, i32) {
    %c0_i32 = arith.constant 0 : i32
    %c0_i32_0 = arith.constant 0 : i32
    %c0_i32_1 = arith.constant 0 : i32
    return %c0_i32, %c0_i32_0 : i32, i32
  }
  func.func @transform_5(%arg0: i32, %arg1: i32) -> (i32, i32) {
    %c0_i32 = arith.constant 0 : i32
    %c0_i32_0 = arith.constant 0 : i32
    return %arg0, %c0_i32 : i32, i32
  }
}

</mosaic_0001>

<llo_original>
// kernel: tpu_custom_call.1
$region0: #{tpu_custom_call.1}
  #allocation0 [shape = 'u32[]', space=smem, size = 0x4, offset = 0x4, fixed_abs, tag = 'smem constant byte address 0x4 - core index']
  #allocation1 [shape = 'u32[144,128]{1,0:T(1,128)}', space=vmem, size = 0x12000, scoped, tag = 'internal scratch']
  #allocation2 [shape = 'f32[16,128]{1,0:T(8,128)}', space=vmem, size = 0x2000, scoped, tag = 'scratch operand']
  %s0 = inlined_call_operand.hbm [shape: bf16[16,128], index: 0, kind: input, shape index: {}]
  %s1 = inlined_call_operand.hbm [shape: bf16[128,128], index: 1, kind: input, shape index: {}]
  %s2 = inlined_call_operand.vmem [shape: f32[1,128], index: 2, kind: input, shape index: {}]
  %s3 = inlined_call_operand.hbm [shape: bf16[128,128], index: 3, kind: input, shape index: {}]
  %s4 = inlined_call_operand.vmem [shape: f32[1,128], index: 4, kind: input, shape index: {}]
  %s5 = inlined_call_operand.hbm [shape: f32[16,128], index: 5, kind: output, shape index: {}]
  %s6 = sld [smem:[#allocation0]]
  $region50: #{tpu_custom_call.1} parent=0
    _
  %s8 = ssub.s32 1, %s6
  %s9 = scalar_select 0, %s8, %s6
  $region1: #{tpu_custom_call.1} parent=0
    #allocation3 [shape = 'u8[4096]{0}', space=vmem, size = 0x1000, scoped, tag = 'input window, operand 0, single buffered']
    #allocation4 [shape = 's32[1]{0}', space=sflag, size = 0x4, scoped, tag = 'scoped memory for tpu_custom_call.1']
    #allocation5 [shape = 's32[1]{0}', space=sflag, size = 0x4, scoped, tag = 'scoped memory for tpu_custom_call.1']
    #allocation6 [shape = 'u8[32768]{0}', space=vmem, size = 0x8000, scoped, tag = 'input window, operand 1, single buffered']
    #allocation7 [shape = 's32[1]{0}', space=sflag, size = 0x4, scoped, tag = 'scoped memory for tpu_custom_call.1']
    #allocation8 [shape = 'u8[32768]{0}', space=vmem, size = 0x8000, scoped, tag = 'input window, operand 3, single buffered']
    #allocation9 [shape = 'u8[8192]{0}', space=vmem, size = 0x2000, scoped, tag = 'output window, operand 0, single buffered']
    %10 = vsyncpa [#allocation4], 0
    %11 = vsyncpa [#allocation7], 0
    %12 = vsyncpa [#allocation5], 0
    // Predicated region
    $region2: #{tpu_custom_call.1} parent=1 // pred_check
      _
    $region3: #{tpu_custom_call.1} parent=1 // pred_check_branch
      %14 = sbr.rel (0) target = $region5
    $region4: #{tpu_custom_call.1} parent=1 // pred_region
      %s16 = ssub.s32 128, 128
      %17 = vsyncadd [#allocation4], %s16
      %s18 = sshll.u32 [#allocation3], 4
      %s19 = int_to_ptr.vmem [resolvable:$true] %s18
      %24 = dma.hbm_to_vmem [thread:$0]  %s0, 128, %s19, [#allocation4], 64, 64, 4
    $region5: #{tpu_custom_call.1} parent=1 // pred_fallthru
      _
    // Predicated region
    $region6: #{tpu_custom_call.1} parent=1 // pred_check
      _
    $region7: #{tpu_custom_call.1} parent=1 // pred_check_branch
      %26 = sbr.rel (0) target = $region9
    $region8: #{tpu_custom_call.1} parent=1 // pred_region
      %s28 = ssub.s32 1024, 1024
      %29 = vsyncadd [#allocation7], %s28
      %s30 = sshll.u32 [#allocation6], 4
      %s31 = int_to_ptr.vmem [resolvable:$true] %s30
      %36 = dma.hbm_to_vmem [thread:$0]  %s1, 1024, %s31, [#allocation7], 64, 64, 4
    $region9: #{tpu_custom_call.1} parent=1 // pred_fallthru
      _
    // Predicated region
    $region10: #{tpu_custom_call.1} parent=1 // pred_check
      _
    $region11: #{tpu_custom_call.1} parent=1 // pred_check_branch
      %38 = sbr.rel (0) target = $region13
    $region12: #{tpu_custom_call.1} parent=1 // pred_region
      _
    $region13: #{tpu_custom_call.1} parent=1 // pred_fallthru
      _
    // Predicated region
    $region14: #{tpu_custom_call.1} parent=1 // pred_check
      _
    $region15: #{tpu_custom_call.1} parent=1 // pred_check_branch
      %40 = sbr.rel (0) target = $region17
    $region16: #{tpu_custom_call.1} parent=1 // pred_region
      %s42 = ssub.s32 1024, 1024
      %43 = vsyncadd [#allocation7], %s42
      %s44 = sshll.u32 [#allocation8], 4
      %s45 = int_to_ptr.vmem [resolvable:$true] %s44
      %50 = dma.hbm_to_vmem [thread:$0]  %s3, 1024, %s45, [#allocation7], 64, 64, 4
    $region17: #{tpu_custom_call.1} parent=1 // pred_fallthru
      _
    // Predicated region
    $region18: #{tpu_custom_call.1} parent=1 // pred_check
      _
    $region19: #{tpu_custom_call.1} parent=1 // pred_check_branch
      %52 = sbr.rel (0) target = $region21
    $region20: #{tpu_custom_call.1} parent=1 // pred_region
      _
    $region21: #{tpu_custom_call.1} parent=1 // pred_fallthru
      _
    // Predicated region
    $region22: #{tpu_custom_call.1} parent=1 // pred_check
      _
    $region23: #{tpu_custom_call.1} parent=1 // pred_check_branch
      %54 = sbr.rel (0) target = $region25
    $region24: #{tpu_custom_call.1} parent=1 // pred_region
      %55 = dma.done [#allocation4], 128
    $region25: #{tpu_custom_call.1} parent=1 // pred_fallthru
      _
    // Predicated region
    $region26: #{tpu_custom_call.1} parent=1 // pred_check
      _
    $region27: #{tpu_custom_call.1} parent=1 // pred_check_branch
      %57 = sbr.rel (0) target = $region29
    $region28: #{tpu_custom_call.1} parent=1 // pred_region
      %58 = dma.done [#allocation7], 1024
    $region29: #{tpu_custom_call.1} parent=1 // pred_fallthru
      _
    // Predicated region
    $region30: #{tpu_custom_call.1} parent=1 // pred_check
      _
    $region31: #{tpu_custom_call.1} parent=1 // pred_check_branch
      %60 = sbr.rel (0) target = $region33
    $region32: #{tpu_custom_call.1} parent=1 // pred_region
      %61 = dma.done [#allocation7], 1024
    $region33: #{tpu_custom_call.1} parent=1 // pred_fallthru
      _
    %p63 = scmp.eq.s32.totalorder 0, 0
    // Predicated region
    $region34: #{tpu_custom_call.1} parent=1 // pred_check
      %p64 = pneg %p63
    $region35: #{tpu_custom_call.1} parent=1 // pred_check_branch
      %66 = sbr.rel (%p64) target = $region37
    $region36: #{tpu_custom_call.1} parent=1 // pred_region
      %67 = vst [vmem:[#allocation2] sm:$0xff] 0.0
      %68 = vst [vmem:[#allocation2 + $0x8] sm:$0xff] 0.0
    $region37: #{tpu_custom_call.1} parent=1 // pred_fallthru
      _
    %v69 = vld [vmem:[#allocation3] sm:$0xf]
    %v70 = vld [vmem:[#allocation3 + $0x4] sm:$0xf]
    %v71 = vld [vmem:[#allocation6] sm:$0xf]
    %v72 = vld [vmem:[#allocation6 + $0x4] sm:$0xf]
    %v73 = vld [vmem:[#allocation6 + $0x8] sm:$0xf]
    %v74 = vld [vmem:[#allocation6 + $0xc] sm:$0xf]
    %v75 = vld [vmem:[#allocation6 + $0x10] sm:$0xf]
    %v76 = vld [vmem:[#allocation6 + $0x14] sm:$0xf]
    %v77 = vld [vmem:[#allocation6 + $0x18] sm:$0xf]
    %v78 = vld [vmem:[#allocation6 + $0x1c] sm:$0xf]
    %v79 = vld [vmem:[#allocation6 + $0x20] sm:$0xf]
    %v80 = vld [vmem:[#allocation6 + $0x24] sm:$0xf]
    %v81 = vld [vmem:[#allocation6 + $0x28] sm:$0xf]
    %v82 = vld [vmem:[#allocation6 + $0x2c] sm:$0xf]
    %v83 = vld [vmem:[#allocation6 + $0x30] sm:$0xf]
    %v84 = vld [vmem:[#allocation6 + $0x34] sm:$0xf]
    %v85 = vld [vmem:[#allocation6 + $0x38] sm:$0xf]
    %v86 = vld [vmem:[#allocation6 + $0x3c] sm:$0xf]
    %v87 = vld [vmem:[%s2] sm:$0x1]
    %v89 = vlaneseq
    %v90 = vshrl.u32 %v89, 7
    %v91 = vsub.s32 0, %v90
    %v92 = vrot.slane %v87, %v91
    %v96 = vunpack.c.l.b16 %v69
    %v97 = vunpack.c.l.b16 %v70
    %v98 = vpack.c.b16 %v97, %v96
    %v116 = vunpack.c.l.b16 %v71
    %v117 = vunpack.c.l.b16 %v72
    %v118 = vunpack.c.l.b16 %v73
    %v119 = vunpack.c.l.b16 %v74
    %v120 = vunpack.c.l.b16 %v75
    %v121 = vunpack.c.l.b16 %v76
    %v122 = vunpack.c.l.b16 %v77
    %v123 = vunpack.c.l.b16 %v78
    %v124 = vunpack.c.l.b16 %v79
    %v125 = vunpack.c.l.b16 %v80
    %v126 = vunpack.c.l.b16 %v81
    %v127 = vunpack.c.l.b16 %v82
    %v128 = vunpack.c.l.b16 %v83
    %v129 = vunpack.c.l.b16 %v84
    %v130 = vunpack.c.l.b16 %v85
    %v131 = vunpack.c.l.b16 %v86
    %v132 = vpack.c.b16 %v117, %v116
    %v133 = vpack.c.b16 %v119, %v118
    %v134 = vpack.c.b16 %v121, %v120
    %v135 = vpack.c.b16 %v123, %v122
    %v136 = vpack.c.b16 %v125, %v124
    %v137 = vpack.c.b16 %v127, %v126
    %v138 = vpack.c.b16 %v129, %v128
    %v139 = vpack.c.b16 %v131, %v130
    %148 = vmatprep.subr.bf16.mxu0 0
    %149 = vmatpush1.bf16.msra.mxu0 %v132
    %150 = vmatprep.subr.bf16.mxu0 0
    %151 = vmatpush1.bf16.msra.mxu0 %v133
    %152 = vmatprep.subr.bf16.mxu0 0
    %153 = vmatpush1.bf16.msra.mxu0 %v134
    %154 = vmatprep.subr.bf16.mxu0 0
    %155 = vmatpush1.bf16.msra.mxu0 %v135
    %156 = vmatprep.subr.bf16.mxu0 0
    %157 = vmatpush1.bf16.msra.mxu0 %v136
    %158 = vmatprep.subr.bf16.mxu0 0
    %159 = vmatpush1.bf16.msra.mxu0 %v137
    %160 = vmatprep.subr.bf16.mxu0 0
    %161 = vmatpush1.bf16.msra.mxu0 %v138
    %162 = vmatprep.subr.bf16.mxu0 0
    %163 = vmatpush1.bf16.msra.mxu0 %v139
    %164 = vmatprep.subr.bf16.mxu0 0
    %165 = vmatpush1.bf16.msra.mxu0 0
    %166 = vmatprep.subr.bf16.mxu0 0
    %167 = vmatpush1.bf16.msra.mxu0 0
    %168 = vmatprep.subr.bf16.mxu0 0
    %169 = vmatpush1.bf16.msra.mxu0 0
    %170 = vmatprep.subr.bf16.mxu0 0
    %171 = vmatpush1.bf16.msra.mxu0 0
    %172 = vmatprep.subr.bf16.mxu0 0
    %173 = vmatpush1.bf16.msra.mxu0 0
    %174 = vmatprep.subr.bf16.mxu0 0
    %175 = vmatpush1.bf16.msra.mxu0 0
    %176 = vmatprep.subr.bf16.mxu0 0
    %177 = vmatpush1.bf16.msra.mxu0 0
    %178 = vmatprep.subr.bf16.mxu0 0
    %179 = vmatpush1.bf16.msra.mxu0 0
    %180 = vmatprep.mubr.bf16.mxu0 0
    %181 = vmatmul.mubr.bf16.gmra.mrb[0].mxu0 %v98
    %v182 = vpop.f32.mrb[0].mxu0
    %v183 = vadd.f32 %v92, %v182
    %v184 = vpop.f32.mrb[0].mxu0
    %v185 = vpop.f32.mrb[0].mxu0
    %v186 = vadd.f32 %v92, %v185
    %v187 = vpop.f32.mrb[0].mxu0
    %188 = vdwg.mxu0
    %v189 = vmax.f32 %v183, 0.0
    %v190 = vmax.f32 %v186, 0.0
    %v191 = vld [vmem:[#allocation2] sm:$0xff]
    %v192 = vld [vmem:[#allocation2 + $0x8] sm:$0xff]
    %v193 = vpack.c.bf16 %v190, %v189
    %v194 = vld [vmem:[#allocation8] sm:$0xf]
    %v195 = vld [vmem:[#allocation8 + $0x4] sm:$0xf]
    %v196 = vld [vmem:[#allocation8 + $0x8] sm:$0xf]
    %v197 = vld [vmem:[#allocation8 + $0xc] sm:$0xf]
    %v198 = vld [vmem:[#allocation8 + $0x10] sm:$0xf]
    %v199 = vld [vmem:[#allocation8 + $0x14] sm:$0xf]
    %v200 = vld [vmem:[#allocation8 + $0x18] sm:$0xf]
    %v201 = vld [vmem:[#allocation8 + $0x1c] sm:$0xf]
    %v202 = vld [vmem:[#allocation8 + $0x20] sm:$0xf]
    %v203 = vld [vmem:[#allocation8 + $0x24] sm:$0xf]
    %v204 = vld [vmem:[#allocation8 + $0x28] sm:$0xf]
    %v205 = vld [vmem:[#allocation8 + $0x2c] sm:$0xf]
    %v206 = vld [vmem:[#allocation8 + $0x30] sm:$0xf]
    %v207 = vld [vmem:[#allocation8 + $0x34] sm:$0xf]
    %v208 = vld [vmem:[#allocation8 + $0x38] sm:$0xf]
    %v209 = vld [vmem:[#allocation8 + $0x3c] sm:$0xf]
    %v226 = vunpack.c.l.b16 %v194
    %v227 = vunpack.c.l.b16 %v195
    %v228 = vunpack.c.l.b16 %v196
    %v229 = vunpack.c.l.b16 %v197
    %v230 = vunpack.c.l.b16 %v198
    %v231 = vunpack.c.l.b16 %v199
    %v232 = vunpack.c.l.b16 %v200
    %v233 = vunpack.c.l.b16 %v201
    %v234 = vunpack.c.l.b16 %v202
    %v235 = vunpack.c.l.b16 %v203
    %v236 = vunpack.c.l.b16 %v204
    %v237 = vunpack.c.l.b16 %v205
    %v238 = vunpack.c.l.b16 %v206
    %v239 = vunpack.c.l.b16 %v207
    %v240 = vunpack.c.l.b16 %v208
    %v241 = vunpack.c.l.b16 %v209
    %v242 = vpack.c.b16 %v227, %v226
    %v243 = vpack.c.b16 %v229, %v228
    %v244 = vpack.c.b16 %v231, %v230
    %v245 = vpack.c.b16 %v233, %v232
    %v246 = vpack.c.b16 %v235, %v234
    %v247 = vpack.c.b16 %v237, %v236
    %v248 = vpack.c.b16 %v239, %v238
    %v249 = vpack.c.b16 %v241, %v240
    %258 = vmatprep.subr.bf16.mxu0 0
    %259 = vmatpush1.bf16.msra.mxu0 %v242
    %260 = vmatprep.subr.bf16.mxu0 0
    %261 = vmatpush1.bf16.msra.mxu0 %v243
    %262 = vmatprep.subr.bf16.mxu0 0
    %263 = vmatpush1.bf16.msra.mxu0 %v244
    %264 = vmatprep.subr.bf16.mxu0 0
    %265 = vmatpush1.bf16.msra.mxu0 %v245
    %266 = vmatprep.subr.bf16.mxu0 0
    %267 = vmatpush1.bf16.msra.mxu0 %v246
    %268 = vmatprep.subr.bf16.mxu0 0
    %269 = vmatpush1.bf16.msra.mxu0 %v247
    %270 = vmatprep.subr.bf16.mxu0 0
    %271 = vmatpush1.bf16.msra.mxu0 %v248
    %272 = vmatprep.subr.bf16.mxu0 0
    %273 = vmatpush1.bf16.msra.mxu0 %v249
    %274 = vmatprep.subr.bf16.mxu0 0
    %275 = vmatpush1.bf16.msra.mxu0 0
    %276 = vmatprep.subr.bf16.mxu0 0
    %277 = vmatpush1.bf16.msra.mxu0 0
    %278 = vmatprep.subr.bf16.mxu0 0
    %279 = vmatpush1.bf16.msra.mxu0 0
    %280 = vmatprep.subr.bf16.mxu0 0
    %281 = vmatpush1.bf16.msra.mxu0 0
    %282 = vmatprep.subr.bf16.mxu0 0
    %283 = vmatpush1.bf16.msra.mxu0 0
    %284 = vmatprep.subr.bf16.mxu0 0
    %285 = vmatpush1.bf16.msra.mxu0 0
    %286 = vmatprep.subr.bf16.mxu0 0
    %287 = vmatpush1.bf16.msra.mxu0 0
    %288 = vmatprep.subr.bf16.mxu0 0
    %289 = vmatpush1.bf16.msra.mxu0 0
    %290 = vmatprep.mubr.bf16.mxu0 0
    %291 = vmatmul.mubr.bf16.gmra.mrb[0].mxu0 %v193
    %v292 = vpop.f32.mrb[0].mxu0
    %v293 = vadd.f32 0.0, %v292
    %v294 = vpop.f32.mrb[0].mxu0
    %v295 = vpop.f32.mrb[0].mxu0
    %v296 = vadd.f32 0.0, %v295
    %v297 = vpop.f32.mrb[0].mxu0
    %298 = vdwg.mxu0
    %v299 = vadd.f32 %v191, %v293
    %v300 = vadd.f32 %v192, %v296
    %301 = vst [vmem:[#allocation2] sm:$0xff] %v299
    %302 = vst [vmem:[#allocation2 + $0x8] sm:$0xff] %v300
    // Predicated region
    $region38: #{tpu_custom_call.1} parent=1 // pred_check
      %p303 = pneg %p63
    $region39: #{tpu_custom_call.1} parent=1 // pred_check_branch
      %305 = sbr.rel (%p303) target = $region41
    $region40: #{tpu_custom_call.1} parent=1 // pred_region
      %v306 = vld [vmem:[#allocation2] sm:$0xff]
      %v307 = vld [vmem:[#allocation2 + $0x8] sm:$0xff]
      %v308 = vld [vmem:[%s4] sm:$0x1]
      %v310 = vlaneseq
      %v311 = vshrl.u32 %v310, 7
      %v312 = vsub.s32 0, %v311
      %v313 = vrot.slane %v308, %v312
      %v315 = vadd.f32 %v306, %v313
      %v316 = vadd.f32 %v307, %v313
      %317 = vst [vmem:[#allocation9] sm:$0xff] %v315
      %318 = vst [vmem:[#allocation9 + $0x8] sm:$0xff] %v316
    $region41: #{tpu_custom_call.1} parent=1 // pred_fallthru
      _
    // Predicated region
    $region42: #{tpu_custom_call.1} parent=1 // pred_check
      _
    $region43: #{tpu_custom_call.1} parent=1 // pred_check_branch
      %320 = sbr.rel (0) target = $region45
    $region44: #{tpu_custom_call.1} parent=1 // pred_region
      %s322 = ssub.s32 256, 256
      %323 = vsyncadd [#allocation5], %s322
      %s324 = sshll.u32 [#allocation9], 4
      %s325 = int_to_ptr.vmem [resolvable:$true] %s324
      %330 = dma.vmem_to_hbm [thread:$0]  %s325, 256, %s5, [#allocation5], 128, 128, 8
    $region45: #{tpu_custom_call.1} parent=1 // pred_fallthru
      _
    // Predicated region
    $region46: #{tpu_custom_call.1} parent=1 // pred_check
      _
    $region47: #{tpu_custom_call.1} parent=1 // pred_check_branch
      %332 = sbr.rel (0) target = $region49
    $region48: #{tpu_custom_call.1} parent=1 // pred_region
      %333 = dma.done [#allocation5], 256
    $region49: #{tpu_custom_call.1} parent=1 // pred_fallthru
      _
    %334 = vsyncpa [#allocation4], 1
    %335 = vsyncpa [#allocation7], 1
    %336 = vsyncpa [#allocation5], 1

</llo_original>
